<compile_context>
chip_gen: v7x
topology: tpu7x:2x2x1
jax: 0.10.0
libtpu: 0.0.40
codegen_flags: <defaults>
</compile_context>

<pallas_src>
import functools

import jax
import jax.numpy as jnp
from jax.experimental import pallas as pl
from jax.experimental.pallas import tpu as pltpu

# Logical model dims.
K_IN, H_MID, N_OUT = 100, 200, 10
# Lane-aligned padded dims for the resident weights (O(1) padding cost).
HP, NP = 256, 128
_NEG_BIG = -1e30  # finite "-inf" for masked softmax columns (exp underflows to 0)


def tiny_model_kernel(x_ref, w1_ref, b1_ref, w2_ref, b2_ref, o_ref):
    # x_ref: (TB, 100)   w1_ref: (100, 256)  b1_ref: (1, 256)
    # w2_ref: (256, 128) b2_ref: (1, 128)    o_ref: (TB, 10)
    x = x_ref[...].astype(w1_ref.dtype)  # in-kernel cast (no extra HBM pass)
    # Linear1 + ReLU (f32 accumulation; elementwise math in f32 for v5e).
    h = jnp.dot(x, w1_ref[...], preferred_element_type=jnp.float32)
    h = jnp.maximum(h + b1_ref[...], 0.0)
    # Linear2. Padded w2 cols are 0 and padded b2 cols are -1e30 -> masked out.
    logits = jnp.dot(h.astype(w2_ref.dtype), w2_ref[...],
                     preferred_element_type=jnp.float32)
    logits = logits + b2_ref[...]
    # Numerically-stable softmax on the deterministic 128-lane logits.
    m = jnp.max(logits, axis=-1, keepdims=True)
    e = jnp.exp(logits - m)
    denom = jnp.sum(e, axis=-1, keepdims=True)
    probs = e * pl.reciprocal(denom, approx=False)
    # Store only the 10 real columns (masked vst; narrow lane-aligned output).
    o_ref[...] = probs[:, :N_OUT].astype(o_ref.dtype)


def _round_up(n, m):
    return ((n + m - 1) // m) * m


@functools.partial(jax.jit, static_argnames=("block_b", "use_bf16_inputs"))
def tiny_model_forward(x, w1, b1, w2, b2, *, block_b=2048, use_bf16_inputs=False):
    """x: (B, 100) f32; w1: (100, 200); b1: (*, 200); w2: (200, 10); b2: (*, 10)."""
    B = x.shape[0]
    mm_dtype = jnp.bfloat16 if use_bf16_inputs else jnp.float32

    # Batch tiling: big tiles for roofline efficiency, but keep >=4 grid steps
    # when possible so the "parallel" axis shards across both v7x TensorCores.
    target_steps = 4
    tb = _round_up(max(1, pl.cdiv(B, target_steps)), 8)
    tb = max(8, min(tb, block_b, _round_up(B, 8)))
    grid = (pl.cdiv(B, tb),)  # ragged last block is masked by Pallas

    # ---- pad only the (O(1)-sized) weights/biases to lane-aligned shapes ----
    w1_p = jnp.zeros((K_IN, HP), mm_dtype).at[:, :H_MID].set(w1.astype(mm_dtype))
    b1_p = jnp.zeros((1, HP), jnp.float32).at[:, :H_MID].set(
        b1.reshape(1, H_MID).astype(jnp.float32))
    w2_p = jnp.zeros((HP, NP), mm_dtype).at[:H_MID, :N_OUT].set(w2.astype(mm_dtype))
    b2_p = jnp.full((1, NP), _NEG_BIG, jnp.float32).at[:, :N_OUT].set(
        b2.reshape(1, N_OUT).astype(jnp.float32))

    wbytes = 2 if use_bf16_inputs else 4
    cost = pl.CostEstimate(
        flops=2 * B * (K_IN * HP + HP * NP),
        transcendentals=B * NP,
        bytes_accessed=(B * K_IN * 4 + B * N_OUT * 4
                        + (K_IN * HP + HP * NP) * wbytes + (HP + NP) * 4),
    )

    out = pl.pallas_call(
        tiny_model_kernel,
        out_shape=jax.ShapeDtypeStruct((B, N_OUT), jnp.float32),
        grid=grid,
        in_specs=[
            pl.BlockSpec((tb, K_IN), lambda i: (i, 0)),   # streamed activations
            pl.BlockSpec((K_IN, HP), lambda i: (0, 0)),   # resident weights
            pl.BlockSpec((1, HP), lambda i: (0, 0)),
            pl.BlockSpec((HP, NP), lambda i: (0, 0)),
            pl.BlockSpec((1, NP), lambda i: (0, 0)),
        ],
        out_specs=pl.BlockSpec((tb, N_OUT), lambda i: (i, 0)),
        compiler_params=pltpu.CompilerParams(
            dimension_semantics=("parallel",)),           # megacore-shard batch
        cost_estimate=cost,
    )(x, w1_p, b1_p, w2_p, b2_p)

    return out  # already (B, 10); no slice pass


def init_params(key):
    # Deterministic synthetic init (PyTorch-style uniform fan-in bounds).
    k1, k2, k3, k4 = jax.random.split(key, 4)
    bound1 = 1.0 / jnp.sqrt(100.0)
    bound2 = 1.0 / jnp.sqrt(200.0)
    w1 = jax.random.uniform(k1, (K_IN, H_MID), jnp.float32, -bound1, bound1)
    b1 = jax.random.uniform(k2, (1, H_MID), jnp.float32, -bound1, bound1)
    w2 = jax.random.uniform(k3, (H_MID, N_OUT), jnp.float32, -bound2, bound2)
    b2 = jax.random.uniform(k4, (1, N_OUT), jnp.float32, -bound2, bound2)
    return w1, b1, w2, b2


def reference_forward(x, w1, b1, w2, b2):
    h = jnp.maximum(x @ w1 + b1, 0.0)
    logits = h @ w2 + b2
    return jax.nn.softmax(logits, axis=-1)


if __name__ == "__main__":
    key = jax.random.PRNGKey(0)
    kx, kp = jax.random.split(key)
    w1, b1, w2, b2 = init_params(kp)

    # Small smoke test (single grid step, tb clamped to 8).
    B = 8
    x = jax.random.normal(kx, (B, K_IN), jnp.float32)
    out = jax.block_until_ready(tiny_model_forward(x, w1, b1, w2, b2))
    ref = reference_forward(x, w1, b1, w2, b2)
    assert out.shape == (B, N_OUT)
    assert jnp.allclose(out, ref, atol=1e-5, rtol=1e-5)

    # Multi-step ragged grid (4 steps of tb=152, last block partial / masked).
    B2 = 600
    x2 = jax.random.normal(jax.random.PRNGKey(1), (B2, K_IN), jnp.float32)
    out2 = jax.block_until_ready(tiny_model_forward(x2, w1, b1, w2, b2))
    ref2 = reference_forward(x2, w1, b1, w2, b2)
    assert out2.shape == (B2, N_OUT)
    assert jnp.allclose(out2, ref2, atol=1e-5, rtol=1e-5)

    # bf16 matmul-input path (native-rate MXU on v5e/v6e/v7x), loose tolerance.
    out3 = jax.block_until_ready(
        tiny_model_forward(x2, w1, b1, w2, b2, use_bf16_inputs=True))
    assert out3.shape == (B2, N_OUT)
    assert jnp.allclose(out3, ref2, atol=5e-2)
    assert jnp.allclose(jnp.sum(out3, axis=-1), 1.0, atol=1e-3)

    print("KERNEL_OK")
</pallas_src>

<mosaic_0001>
module attributes {stable_mosaic.version = 11 : i64} {
  func.func @tiny_model_kernel(%arg0: i32, %arg1: memref<8x100xf32, #tpu.memory_space<vmem>>, %arg2: memref<100x256xf32, #tpu.memory_space<vmem>>, %arg3: memref<1x256xf32, #tpu.memory_space<vmem>>, %arg4: memref<256x128xf32, #tpu.memory_space<vmem>>, %arg5: memref<1x128xf32, #tpu.memory_space<vmem>>, %arg6: memref<8x10xf32, #tpu.memory_space<vmem>>) attributes {dimension_semantics = [#tpu.dimension_semantics<parallel>], iteration_bounds = array<i64: 1>, scalar_prefetch = 0 : i64, scratch_operands = 0 : i64, tpu.core_type = #tpu.core_type<tc>, window_params = [{transform_indices = @transform_0, window_bounds = array<i64: 8, 100>}, {pipeline_mode = #tpu.pipeline_mode<synchronous>, transform_indices = @transform_1, window_bounds = array<i64: 100, 256>}, {pipeline_mode = #tpu.pipeline_mode<synchronous>, transform_indices = @transform_2, window_bounds = array<i64: 1, 256>}, {pipeline_mode = #tpu.pipeline_mode<synchronous>, transform_indices = @transform_3, window_bounds = array<i64: 256, 128>}, {pipeline_mode = #tpu.pipeline_mode<synchronous>, transform_indices = @transform_4, window_bounds = array<i64: 1, 128>}, {transform_indices = @transform_5, window_bounds = array<i64: 8, 10>}]} {
    %c0 = arith.constant 0 : index
    %c0_0 = arith.constant 0 : index
    %0 = vector.load %arg1[%c0, %c0_0] : memref<8x100xf32, #tpu.memory_space<vmem>>, vector<8x100xf32>
    %c0_1 = arith.constant 0 : index
    %c0_2 = arith.constant 0 : index
    %1 = vector.load %arg2[%c0_1, %c0_2] : memref<100x256xf32, #tpu.memory_space<vmem>>, vector<100x256xf32>
    %cst = arith.constant dense<0.000000e+00> : vector<8x256xf32>
    %2 = tpu.matmul %0, %1, %cst {dimension_numbers = #tpu.dot_dimension_numbers<[1], [0], [0], [1], [0, 0, 1, 1], [], []>} : vector<8x100xf32>, vector<100x256xf32>, vector<8x256xf32> -> vector<8x256xf32>
    %c0_3 = arith.constant 0 : index
    %c0_4 = arith.constant 0 : index
    %3 = vector.load %arg3[%c0_3, %c0_4] : memref<1x256xf32, #tpu.memory_space<vmem>>, vector<1x256xf32>
    %4 = vector.broadcast %3 : vector<1x256xf32> to vector<8x256xf32>
    %5 = arith.addf %2, %4 : vector<8x256xf32>
    %cst_5 = arith.constant 0.000000e+00 : f32
    %6 = vector.broadcast %cst_5 : f32 to vector<8x256xf32>
    %7 = arith.maximumf %5, %6 : vector<8x256xf32>
    %c0_6 = arith.constant 0 : index
    %c0_7 = arith.constant 0 : index
    %8 = vector.load %arg4[%c0_6, %c0_7] : memref<256x128xf32, #tpu.memory_space<vmem>>, vector<256x128xf32>
    %cst_8 = arith.constant dense<0.000000e+00> : vector<8x128xf32>
    %9 = tpu.matmul %7, %8, %cst_8 {dimension_numbers = #tpu.dot_dimension_numbers<[1], [0], [0], [1], [0, 0, 1, 1], [], []>} : vector<8x256xf32>, vector<256x128xf32>, vector<8x128xf32> -> vector<8x128xf32>
    %c0_9 = arith.constant 0 : index
    %c0_10 = arith.constant 0 : index
    %10 = vector.load %arg5[%c0_9, %c0_10] : memref<1x128xf32, #tpu.memory_space<vmem>>, vector<1x128xf32>
    %11 = vector.broadcast %10 : vector<1x128xf32> to vector<8x128xf32>
    %12 = arith.addf %9, %11 : vector<8x128xf32>
    %cst_11 = arith.constant dense<0xFF800000> : vector<8xf32>
    %13 = vector.multi_reduction <maximumf>, %12, %cst_11 [1] : vector<8x128xf32> to vector<8xf32>
    %14 = vector.shape_cast %13 : vector<8xf32> to vector<8x1xf32>
    %15 = vector.broadcast %14 : vector<8x1xf32> to vector<8x128xf32>
    %16 = arith.subf %12, %15 : vector<8x128xf32>
    %17 = math.exp %16 : vector<8x128xf32>
    %cst_12 = arith.constant dense<0.000000e+00> : vector<8xf32>
    %18 = vector.multi_reduction <add>, %17, %cst_12 [1] : vector<8x128xf32> to vector<8xf32>
    %19 = vector.shape_cast %18 : vector<8xf32> to vector<8x1xf32>
    %20 = tpu.reciprocal %19 : vector<8x1xf32> -> vector<8x1xf32>
    %21 = vector.broadcast %20 : vector<8x1xf32> to vector<8x128xf32>
    %22 = arith.mulf %17, %21 : vector<8x128xf32>
    %23 = vector.extract_strided_slice %22 {offsets = [0, 0], sizes = [8, 10], strides = [1, 1]} : vector<8x128xf32> to vector<8x10xf32>
    %c0_13 = arith.constant 0 : index
    %c0_14 = arith.constant 0 : index
    %24 = vector.load %arg6[%c0_13, %c0_14] : memref<8x10xf32, #tpu.memory_space<vmem>>, vector<8x10xf32>
    tpu.vector_store %arg6[%c0_13, %c0_14], %23 {strides = array<i32>} : memref<8x10xf32, #tpu.memory_space<vmem>>, vector<8x10xf32>,
    return
  }
  func.func @transform_0(%arg0: i32) -> (i32, i32) {
    %c0_i32 = arith.constant 0 : i32
    %c0_i32_0 = arith.constant 0 : i32
    return %arg0, %c0_i32 : i32, i32
  }
  func.func @transform_1(%arg0: i32) -> (i32, i32) {
    %c0_i32 = arith.constant 0 : i32
    %c0_i32_0 = arith.constant 0 : i32
    %c0_i32_1 = arith.constant 0 : i32
    return %c0_i32, %c0_i32_0 : i32, i32
  }
  func.func @transform_2(%arg0: i32) -> (i32, i32) {
    %c0_i32 = arith.constant 0 : i32
    %c0_i32_0 = arith.constant 0 : i32
    %c0_i32_1 = arith.constant 0 : i32
    return %c0_i32, %c0_i32_0 : i32, i32
  }
  func.func @transform_3(%arg0: i32) -> (i32, i32) {
    %c0_i32 = arith.constant 0 : i32
    %c0_i32_0 = arith.constant 0 : i32
    %c0_i32_1 = arith.constant 0 : i32
    return %c0_i32, %c0_i32_0 : i32, i32
  }
  func.func @transform_4(%arg0: i32) -> (i32, i32) {
    %c0_i32 = arith.constant 0 : i32
    %c0_i32_0 = arith.constant 0 : i32
    %c0_i32_1 = arith.constant 0 : i32
    return %c0_i32, %c0_i32_0 : i32, i32
  }
  func.func @transform_5(%arg0: i32) -> (i32, i32) {
    %c0_i32 = arith.constant 0 : i32
    %c0_i32_0 = arith.constant 0 : i32
    return %arg0, %c0_i32 : i32, i32
  }
}

</mosaic_0001>

<llo_original>
// kernel: tiny_model_forward.1
$region0: #{tiny_model_forward.1}
  #allocation0 [shape = 'u32[]', space=smem, size = 0x4, offset = 0x4, fixed_abs, tag = 'smem constant byte address 0x4 - core index']
  #allocation1 [shape = 'u32[144,128]{1,0:T(1,128)}', space=vmem, size = 0x12000, scoped, tag = 'internal scratch']
  %s0 = inlined_call_operand.vmem [shape: f32[8,100], index: 0, kind: input, shape index: {}]
  %s1 = inlined_call_operand.vmem [shape: f32[100,256], index: 1, kind: input, shape index: {}]
  %s2 = inlined_call_operand.vmem [shape: f32[1,256], index: 2, kind: input, shape index: {}]
  %s3 = inlined_call_operand.vmem [shape: f32[256,128], index: 3, kind: input, shape index: {}]
  %s4 = inlined_call_operand.vmem [shape: f32[1,128], index: 4, kind: input, shape index: {}]
  %s5 = inlined_call_operand.hbm [shape: f32[8,10], index: 5, kind: output, shape index: {}]
  %s6 = sld [smem:[#allocation0]]
  $region30: #{tiny_model_forward.1} parent=0
    _
  %s8 = ssub.s32 1, %s6
  %s9 = scalar_select 0, %s8, %s6
  $region1: #{tiny_model_forward.1} parent=0
    #allocation2 [shape = 'u8[4096]{0}', space=vmem, size = 0x1000, scoped, tag = 'output window, operand 0, single buffered']
    #allocation3 [shape = 's32[1]{0}', space=sflag, size = 0x4, scoped, tag = 'scoped memory for tiny_model_forward.1']
    %10 = vsyncpa [#allocation3], 0
    // Predicated region
    $region2: #{tiny_model_forward.1} parent=1 // pred_check
      _
    $region3: #{tiny_model_forward.1} parent=1 // pred_check_branch
      %12 = sbr.rel (0) target = $region5
    $region4: #{tiny_model_forward.1} parent=1 // pred_region
      _
    $region5: #{tiny_model_forward.1} parent=1 // pred_fallthru
      _
    // Predicated region
    $region6: #{tiny_model_forward.1} parent=1 // pred_check
      _
    $region7: #{tiny_model_forward.1} parent=1 // pred_check_branch
      %14 = sbr.rel (0) target = $region9
    $region8: #{tiny_model_forward.1} parent=1 // pred_region
      _
    $region9: #{tiny_model_forward.1} parent=1 // pred_fallthru
      _
    // Predicated region
    $region10: #{tiny_model_forward.1} parent=1 // pred_check
      _
    $region11: #{tiny_model_forward.1} parent=1 // pred_check_branch
      %16 = sbr.rel (0) target = $region13
    $region12: #{tiny_model_forward.1} parent=1 // pred_region
      _
    $region13: #{tiny_model_forward.1} parent=1 // pred_fallthru
      _
    // Predicated region
    $region14: #{tiny_model_forward.1} parent=1 // pred_check
      _
    $region15: #{tiny_model_forward.1} parent=1 // pred_check_branch
      %18 = sbr.rel (0) target = $region17
    $region16: #{tiny_model_forward.1} parent=1 // pred_region
      _
    $region17: #{tiny_model_forward.1} parent=1 // pred_fallthru
      _
    // Predicated region
    $region18: #{tiny_model_forward.1} parent=1 // pred_check
      _
    $region19: #{tiny_model_forward.1} parent=1 // pred_check_branch
      %20 = sbr.rel (0) target = $region21
    $region20: #{tiny_model_forward.1} parent=1 // pred_region
      _
    $region21: #{tiny_model_forward.1} parent=1 // pred_fallthru
      _
    %v21 = vld [vmem:[%s0] sm:$0xff]
    %v22 = vld [vmem:[%s1] sm:$0xff]
    %v23 = vld [vmem:[%s1 + $0x8] sm:$0xff]
    %v24 = vld [vmem:[%s1 + $0x10] sm:$0xff]
    %v25 = vld [vmem:[%s1 + $0x18] sm:$0xff]
    %v26 = vld [vmem:[%s1 + $0x20] sm:$0xff]
    %v27 = vld [vmem:[%s1 + $0x28] sm:$0xff]
    %v28 = vld [vmem:[%s1 + $0x30] sm:$0xff]
    %v29 = vld [vmem:[%s1 + $0x38] sm:$0xff]
    %v30 = vld [vmem:[%s1 + $0x40] sm:$0xff]
    %v31 = vld [vmem:[%s1 + $0x48] sm:$0xff]
    %v32 = vld [vmem:[%s1 + $0x50] sm:$0xff]
    %v33 = vld [vmem:[%s1 + $0x58] sm:$0xff]
    %v34 = vld [vmem:[%s1 + $0x60] sm:$0xff]
    %v35 = vld [vmem:[%s1 + $0x68] sm:$0xff]
    %v36 = vld [vmem:[%s1 + $0x70] sm:$0xff]
    %v37 = vld [vmem:[%s1 + $0x78] sm:$0xff]
    %v38 = vld [vmem:[%s1 + $0x80] sm:$0xff]
    %v39 = vld [vmem:[%s1 + $0x88] sm:$0xff]
    %v40 = vld [vmem:[%s1 + $0x90] sm:$0xff]
    %v41 = vld [vmem:[%s1 + $0x98] sm:$0xff]
    %v42 = vld [vmem:[%s1 + $0xa0] sm:$0xff]
    %v43 = vld [vmem:[%s1 + $0xa8] sm:$0xff]
    %v44 = vld [vmem:[%s1 + $0xb0] sm:$0xff]
    %v45 = vld [vmem:[%s1 + $0xb8] sm:$0xff]
    %v46 = vld [vmem:[%s1 + $0xc0] sm:$0xf]
    %v47 = vld [vmem:[%s1 + $0xc8] sm:$0xf]
    %v48 = vld [vmem:[%s2] sm:$0x3]
    %v50 = vlaneseq
    %v51 = vshrl.u32 %v50, 7
    %v52 = vsub.s32 0, %v51
    %v53 = vrot.slane %v48, %v52
    %v54 = vlaneseq
    %v55 = vshrl.u32 %v54, 7
    %v56 = vsub.s32 1, %v55
    %v57 = vrot.slane %v48, %v56
    %vm60 = vcmask 818176
    %v62 = vsel %vm60, %v21, 0
    %vm64 = vcmask 1043456
    %v66 = vsel %vm64, %v46, 0
    %v69 = vsel %vm64, %v47, 0
    %71 = vmatprep.subr.mxu0 %v23
    %72 = vmatpush1.msra.mxu0 %v22
    %73 = vmatprep.subr.mxu0 %v25
    %74 = vmatpush1.msra.mxu0 %v24
    %75 = vmatprep.subr.mxu0 %v27
    %76 = vmatpush1.msra.mxu0 %v26
    %77 = vmatprep.subr.mxu0 %v29
    %78 = vmatpush1.msra.mxu0 %v28
    %79 = vmatprep.subr.mxu0 %v31
    %80 = vmatpush1.msra.mxu0 %v30
    %81 = vmatprep.subr.mxu0 %v33
    %82 = vmatpush1.msra.mxu0 %v32
    %83 = vmatprep.subr.mxu0 %v35
    %84 = vmatpush1.msra.mxu0 %v34
    %85 = vmatprep.subr.mxu0 %v37
    %86 = vmatpush1.msra.mxu0 %v36
    %87 = vmatprep.subr.mxu0 %v39
    %88 = vmatpush1.msra.mxu0 %v38
    %89 = vmatprep.subr.mxu0 %v41
    %90 = vmatpush1.msra.mxu0 %v40
    %91 = vmatprep.subr.mxu0 %v43
    %92 = vmatpush1.msra.mxu0 %v42
    %93 = vmatprep.subr.mxu0 %v45
    %94 = vmatpush1.msra.mxu0 %v44
    %95 = vmatprep.subr.mxu0 %v69
    %96 = vmatpush1.msra.mxu0 %v66
    %97 = vmatprep.subr.mxu0 0.0
    %98 = vmatpush1.msra.mxu0 0.0
    %99 = vmatprep.subr.mxu0 0.0
    %100 = vmatpush1.msra.mxu0 0.0
    %101 = vmatprep.subr.mxu0 0.0
    %102 = vmatpush1.msra.mxu0 0.0
    %103 = vmatprep.subr.mxu0 0.0
    %104 = vmatpush1.msra.mxu0 0.0
    %105 = vmatprep.subr.mxu0 0.0
    %106 = vmatpush1.msra.mxu0 0.0
    %107 = vmatprep.subr.mxu0 0.0
    %108 = vmatpush1.msra.mxu0 0.0
    %109 = vmatprep.subr.mxu0 0.0
    %110 = vmatpush1.msra.mxu0 0.0
    %111 = vmatprep.subr.mxu0 0.0
    %112 = vmatpush1.msra.mxu0 0.0
    %113 = vmatprep.subr.mxu0 0.0
    %114 = vmatpush1.msra.mxu0 0.0
    %115 = vmatprep.subr.mxu0 0.0
    %116 = vmatpush1.msra.mxu0 0.0
    %117 = vmatprep.subr.mxu0 0.0
    %118 = vmatpush1.msra.mxu0 0.0
    %119 = vmatprep.subr.mxu0 0.0
    %120 = vmatpush1.msra.mxu0 0.0
    %121 = vmatprep.subr.mxu0 0.0
    %122 = vmatpush1.msra.mxu0 0.0
    %123 = vmatprep.subr.mxu0 0.0
    %124 = vmatpush1.msra.mxu0 0.0
    %125 = vmatprep.subr.mxu0 0.0
    %126 = vmatpush1.msra.mxu0 0.0
    %127 = vmatprep.subr.mxu0 0.0
    %128 = vmatpush1.msra.mxu0 0.0
    %129 = vmatprep.subr.mxu0 0.0
    %130 = vmatpush1.msra.mxu0 0.0
    %131 = vmatprep.subr.mxu0 0.0
    %132 = vmatpush1.msra.mxu0 0.0
    %133 = vmatprep.subr.mxu0 0.0
    %134 = vmatpush1.msra.mxu0 0.0
    %135 = vmatprep.mubr.f32.mxu0 0.0
    %136 = vmatmul.mubr.f32.gmra.mrb[0].mxu0 %v62
    %v137 = vpop.f32.mrb[0].mxu0
    %v138 = vadd.f32 %v53, %v137
    %v139 = vpop.f32.mrb[0].mxu0
    %v140 = vadd.f32 %v57, %v139
    %141 = vdwg.mxu0
    %v142 = vmax.f32 %v138, 0.0
    %v143 = vmax.f32 %v140, 0.0
    %v144 = vld [vmem:[%s3] sm:$0xff]
    %v145 = vld [vmem:[%s3 + $0x8] sm:$0xff]
    %v146 = vld [vmem:[%s3 + $0x10] sm:$0xff]
    %v147 = vld [vmem:[%s3 + $0x18] sm:$0xff]
    %v148 = vld [vmem:[%s3 + $0x20] sm:$0xff]
    %v149 = vld [vmem:[%s3 + $0x28] sm:$0xff]
    %v150 = vld [vmem:[%s3 + $0x30] sm:$0xff]
    %v151 = vld [vmem:[%s3 + $0x38] sm:$0xff]
    %v152 = vld [vmem:[%s3 + $0x40] sm:$0xff]
    %v153 = vld [vmem:[%s3 + $0x48] sm:$0xff]
    %v154 = vld [vmem:[%s3 + $0x50] sm:$0xff]
    %v155 = vld [vmem:[%s3 + $0x58] sm:$0xff]
    %v156 = vld [vmem:[%s3 + $0x60] sm:$0xff]
    %v157 = vld [vmem:[%s3 + $0x68] sm:$0xff]
    %v158 = vld [vmem:[%s3 + $0x70] sm:$0xff]
    %v159 = vld [vmem:[%s3 + $0x78] sm:$0xff]
    %v160 = vld [vmem:[%s3 + $0x80] sm:$0xff]
    %v161 = vld [vmem:[%s3 + $0x88] sm:$0xff]
    %v162 = vld [vmem:[%s3 + $0x90] sm:$0xff]
    %v163 = vld [vmem:[%s3 + $0x98] sm:$0xff]
    %v164 = vld [vmem:[%s3 + $0xa0] sm:$0xff]
    %v165 = vld [vmem:[%s3 + $0xa8] sm:$0xff]
    %v166 = vld [vmem:[%s3 + $0xb0] sm:$0xff]
    %v167 = vld [vmem:[%s3 + $0xb8] sm:$0xff]
    %v168 = vld [vmem:[%s3 + $0xc0] sm:$0xff]
    %v169 = vld [vmem:[%s3 + $0xc8] sm:$0xff]
    %v170 = vld [vmem:[%s3 + $0xd0] sm:$0xff]
    %v171 = vld [vmem:[%s3 + $0xd8] sm:$0xff]
    %v172 = vld [vmem:[%s3 + $0xe0] sm:$0xff]
    %v173 = vld [vmem:[%s3 + $0xe8] sm:$0xff]
    %v174 = vld [vmem:[%s3 + $0xf0] sm:$0xff]
    %v175 = vld [vmem:[%s3 + $0xf8] sm:$0xff]
    %v176 = vld [vmem:[%s4] sm:$0x1]
    %v178 = vlaneseq
    %v179 = vshrl.u32 %v178, 7
    %v180 = vsub.s32 0, %v179
    %v181 = vrot.slane %v176, %v180
    %183 = vmatprep.subr.mxu0 0.0
    %184 = vmatpush1.msra.mxu0 %v144
    %185 = vmatprep.subr.mxu0 0.0
    %186 = vmatpush1.msra.mxu0 %v145
    %187 = vmatprep.subr.mxu0 0.0
    %188 = vmatpush1.msra.mxu0 %v146
    %189 = vmatprep.subr.mxu0 0.0
    %190 = vmatpush1.msra.mxu0 %v147
    %191 = vmatprep.subr.mxu0 0.0
    %192 = vmatpush1.msra.mxu0 %v148
    %193 = vmatprep.subr.mxu0 0.0
    %194 = vmatpush1.msra.mxu0 %v149
    %195 = vmatprep.subr.mxu0 0.0
    %196 = vmatpush1.msra.mxu0 %v150
    %197 = vmatprep.subr.mxu0 0.0
    %198 = vmatpush1.msra.mxu0 %v151
    %199 = vmatprep.subr.mxu0 0.0
    %200 = vmatpush1.msra.mxu0 %v152
    %201 = vmatprep.subr.mxu0 0.0
    %202 = vmatpush1.msra.mxu0 %v153
    %203 = vmatprep.subr.mxu0 0.0
    %204 = vmatpush1.msra.mxu0 %v154
    %205 = vmatprep.subr.mxu0 0.0
    %206 = vmatpush1.msra.mxu0 %v155
    %207 = vmatprep.subr.mxu0 0.0
    %208 = vmatpush1.msra.mxu0 %v156
    %209 = vmatprep.subr.mxu0 0.0
    %210 = vmatpush1.msra.mxu0 %v157
    %211 = vmatprep.subr.mxu0 0.0
    %212 = vmatpush1.msra.mxu0 %v158
    %213 = vmatprep.subr.mxu0 0.0
    %214 = vmatpush1.msra.mxu0 %v159
    %215 = vmatprep.subr.mxu0 0.0
    %216 = vmatpush1.msra.mxu0 %v160
    %217 = vmatprep.subr.mxu0 0.0
    %218 = vmatpush1.msra.mxu0 %v161
    %219 = vmatprep.subr.mxu0 0.0
    %220 = vmatpush1.msra.mxu0 %v162
    %221 = vmatprep.subr.mxu0 0.0
    %222 = vmatpush1.msra.mxu0 %v163
    %223 = vmatprep.subr.mxu0 0.0
    %224 = vmatpush1.msra.mxu0 %v164
    %225 = vmatprep.subr.mxu0 0.0
    %226 = vmatpush1.msra.mxu0 %v165
    %227 = vmatprep.subr.mxu0 0.0
    %228 = vmatpush1.msra.mxu0 %v166
    %229 = vmatprep.subr.mxu0 0.0
    %230 = vmatpush1.msra.mxu0 %v167
    %231 = vmatprep.subr.mxu0 0.0
    %232 = vmatpush1.msra.mxu0 %v168
    %233 = vmatprep.subr.mxu0 0.0
    %234 = vmatpush1.msra.mxu0 %v169
    %235 = vmatprep.subr.mxu0 0.0
    %236 = vmatpush1.msra.mxu0 %v170
    %237 = vmatprep.subr.mxu0 0.0
    %238 = vmatpush1.msra.mxu0 %v171
    %239 = vmatprep.subr.mxu0 0.0
    %240 = vmatpush1.msra.mxu0 %v172
    %241 = vmatprep.subr.mxu0 0.0
    %242 = vmatpush1.msra.mxu0 %v173
    %243 = vmatprep.subr.mxu0 0.0
    %244 = vmatpush1.msra.mxu0 %v174
    %245 = vmatprep.subr.mxu0 0.0
    %246 = vmatpush1.msra.mxu0 %v175
    %247 = vmatprep.mubr.f32.mxu0 %v143
    %248 = vmatmul.mubr.f32.gmra.mrb[0].mxu0 %v142
    %v249 = vpop.f32.mrb[0].mxu0
    %v250 = vadd.f32 %v181, %v249
    %v251 = vpop.f32.mrb[0].mxu0
    %252 = vdwg.mxu0
    %253 = vmax.xlane.f32.xlu0 %v250
    %v254 = vpop.xlane.xlu0 %253
    %v255 = vsub.f32 %v250, %v254
    %v256 = vmul.f32 %v255, 1.442695
    %v257 = vpow.pop %v256
    %258 = vadd.xlane.f32.xlu0 %v257
    %v259 = vpop.xlane.xlu0 %258
    %v260 = vrcp.pop %v259
    %v261 = vmul.f32 %v257, %v260
    %vm262 = vcmask 80896
    %263 = vst.msk [vmem:[#allocation2] sm:$0xff] %vm262, %v261
    // Predicated region
    $region22: #{tiny_model_forward.1} parent=1 // pred_check
      _
    $region23: #{tiny_model_forward.1} parent=1 // pred_check_branch
      %265 = sbr.rel (0) target = $region25
    $region24: #{tiny_model_forward.1} parent=1 // pred_region
      %s267 = ssub.s32 128, 128
      %268 = vsyncadd [#allocation3], %s267
      %s270 = sshll.u32 [#allocation2], 4
      %s271 = int_to_ptr.vmem [resolvable:$true] %s270
      %273 = dma.vmem_to_hbm [thread:$0]  %s271, 128, %s5, [#allocation3]
    $region25: #{tiny_model_forward.1} parent=1 // pred_fallthru
      _
    // Predicated region
    $region26: #{tiny_model_forward.1} parent=1 // pred_check
      _
    $region27: #{tiny_model_forward.1} parent=1 // pred_check_branch
      %275 = sbr.rel (0) target = $region29
    $region28: #{tiny_model_forward.1} parent=1 // pred_region
      %276 = dma.done [#allocation3], 128
    $region29: #{tiny_model_forward.1} parent=1 // pred_fallthru
      _
    %277 = vsyncpa [#allocation3], 1

</llo_original>
